<compile_context>
chip_gen: v5e
topology: v5e:2x2
jax: 0.10.0
libtpu: 0.0.40
codegen_flags: <defaults>
</compile_context>

<pallas_src>
import functools

import jax
import jax.numpy as jnp
from jax.experimental import pallas as pl
from jax.experimental.pallas import tpu as pltpu

LANES = 128      # vreg lane width; every hidden / output stage uses this width
HIDDEN1 = 64
HIDDEN2 = 64
SEC_ALIGN = 16   # bf16 sublane tile height; all packed sections are 16-aligned


def _round_up(n, m):
    return ((n + m - 1) // m) * m


def pack_params(params, state_size, action_size,
                hidden1=HIDDEN1, hidden2=HIDDEN2):
    """Fuse + zero-pad the 10 per-layer tensors into one bf16 (rows, 128) buffer.

    Returns (packed_bf16, offsets) where offsets are the 16-aligned starting
    rows of (W1, B1, W2, W3, B3).  b2 (= [bv1|ba1]) is folded into W2 row 127
    via the constant-1 lane trick, so it has no section of its own.
    """
    (w1, b1, wv1, bv1, wv2, bv2, wa1, ba1, wa2, ba2) = params
    A = action_size
    # Lane 127 of stage 1 must be unused by real weights for the b2 fold.
    assert hidden1 < LANES, "b2-fold requires a spare stage-1 lane (hidden1 < 128)"
    assert 2 * hidden2 <= LANES and 1 + A <= LANES

    k_pad = _round_up(state_size, SEC_ALIGN)

    # Stage 1: fc1 padded to 128 output lanes and k_pad input rows.
    # Bias lane 127 = 1.0 so x[:,127] == relu(0 + 1) == 1 after stage 1.
    W1 = jnp.zeros((k_pad, LANES), jnp.float32).at[:state_size, :hidden1].set(w1)
    B1 = jnp.zeros((1, LANES), jnp.float32).at[:, :hidden1].set(b1)
    B1 = B1.at[:, LANES - 1].set(1.0)

    # Stage 2: fused [vfc1 | afc1]; row 127 carries the fused bias [bv1 | ba1]
    # (multiplied by the constant-1 lane of x).
    W2 = jnp.zeros((LANES, LANES), jnp.float32)
    W2 = W2.at[:hidden1, :hidden2].set(wv1)
    W2 = W2.at[:hidden1, hidden2:2 * hidden2].set(wa1)
    W2 = W2.at[LANES - 1, :hidden2].set(bv1[0])
    W2 = W2.at[LANES - 1, hidden2:2 * hidden2].set(ba1[0])

    # Stage 3: block-diagonal [vfc2 ; afc2]; column 0 = v, columns 1..A = a.
    W3 = jnp.zeros((LANES, LANES), jnp.float32)
    W3 = W3.at[:hidden2, 0:1].set(wv2)
    W3 = W3.at[hidden2:2 * hidden2, 1:1 + A].set(wa2)
    B3 = jnp.zeros((1, LANES), jnp.float32)
    B3 = B3.at[:, 0:1].set(bv2)
    B3 = B3.at[:, 1:1 + A].set(ba2)

    sections = (W1, B1, W2, W3, B3)
    offsets, padded, row = [], [], 0
    for sec in sections:
        offsets.append(row)
        r = _round_up(sec.shape[0], SEC_ALIGN)           # bf16 sublane alignment
        pad = jnp.zeros((r, LANES), jnp.float32).at[:sec.shape[0], :].set(sec)
        padded.append(pad)
        row += r
    packed = jnp.concatenate(padded, axis=0).astype(jnp.bfloat16)
    return packed, tuple(offsets)


def _dueling_kernel(s_ref, p_ref, q_ref, *, action_size, offsets):
    o_w1, o_b1, o_w2, o_w3, o_b3 = offsets
    A = action_size
    k_pad = s_ref.shape[1]

    # All reads below are full 16-row-aligned bf16 tiles; cast to f32 in VMEM
    # so the MXU/VPU math is f32 (HBM traffic already halved by bf16 storage).
    w1 = p_ref[o_w1:o_w1 + k_pad, :].astype(jnp.float32)
    w2 = p_ref[o_w2:o_w2 + LANES, :].astype(jnp.float32)
    w3 = p_ref[o_w3:o_w3 + LANES, :].astype(jnp.float32)
    # Bias sections are zero-padded 16-row tiles: a sublane sum recovers the
    # (1, 128) bias exactly without sub-tile packed-dtype slicing.
    b1 = jnp.sum(p_ref[o_b1:o_b1 + SEC_ALIGN, :].astype(jnp.float32),
                 axis=0, keepdims=True)
    b3 = jnp.sum(p_ref[o_b3:o_b3 + SEC_ALIGN, :].astype(jnp.float32),
                 axis=0, keepdims=True)

    # fc1 + relu: lanes 64..126 stay exactly 0, lane 127 == 1 (b2-fold lane).
    x = jnp.maximum(
        jnp.dot(s_ref[...], w1, preferred_element_type=jnp.float32) + b1, 0.0)
    # fused [vfc1 | afc1] + relu, with b2 folded into W2 row 127.
    h = jnp.maximum(
        jnp.dot(x, w2, preferred_element_type=jnp.float32), 0.0)
    # fused block-diagonal [vfc2 | afc2]: col 0 = v, cols 1..A = a, rest exact 0.
    out = jnp.dot(h, w3, preferred_element_type=jnp.float32) + b3

    B = out.shape[0]
    lane = jax.lax.broadcasted_iota(jnp.int32, out.shape, 1)
    a_mask = (lane >= 1) & (lane <= A)
    # mean over ALL elements of a for this call (batch x actions), like torch.
    a_mean = jnp.sum(jnp.where(a_mask, out, 0.0)) * (1.0 / (B * A))
    v = out[:, 0:1]                                        # (B, 1) value column
    # lane-dense q slab: valid q in lanes 1..A, zeros elsewhere.
    q_ref[...] = jnp.where(a_mask, v + out - a_mean, 0.0)


def dueling_forward(states, packed_params, offsets, action_size):
    """states: (num_calls, B, state_size) -> q: (num_calls, B, action_size)."""
    N, B, state_size = states.shape
    assert B % 8 == 0, "per-call batch must be a multiple of 8 sublanes"
    k_pad = _round_up(state_size, SEC_ALIGN)

    flat = states.reshape(N * B, state_size)
    if k_pad != state_size:
        flat = jnp.pad(flat, ((0, 0), (0, k_pad - state_size)))

    kernel = functools.partial(_dueling_kernel, action_size=action_size,
                               offsets=offsets)
    slab = pl.pallas_call(
        kernel,
        out_shape=jax.ShapeDtypeStruct((N * B, LANES), jnp.float32),
        grid=(N,),
        in_specs=[
            pl.BlockSpec((B, k_pad), lambda i: (i, 0)),
            # constant block index -> params DMA'd once, VMEM-resident.
            pl.BlockSpec(packed_params.shape, lambda i: (0, 0)),
        ],
        out_specs=pl.BlockSpec((B, LANES), lambda i: (i, 0)),
        compiler_params=pltpu.CompilerParams(
            dimension_semantics=("parallel",)),   # 2 TCs on v7x; no-op elsewhere
    )(flat, packed_params)
    # valid q values live in lanes 1..A of the lane-dense slab.
    return slab[:, 1:1 + action_size].reshape(N, B, action_size)


def init_params(key, state_size, action_size, hidden1=HIDDEN1, hidden2=HIDDEN2):
    """Deterministic init mimicking nn.Linear's U(-1/sqrt(fan_in), 1/sqrt(fan_in)).
    Weights stored as (in_features, out_features), biases as (1, out)."""
    def linear(k, fan_in, fan_out):
        kw, kb = jax.random.split(k)
        bound = 1.0 / jnp.sqrt(fan_in)
        w = jax.random.uniform(kw, (fan_in, fan_out), jnp.float32, -bound, bound)
        b = jax.random.uniform(kb, (1, fan_out), jnp.float32, -bound, bound)
        return w, b

    k1, k2, k3, k4, k5 = jax.random.split(key, 5)
    w1, b1 = linear(k1, state_size, hidden1)     # fc1
    wv1, bv1 = linear(k2, hidden1, hidden2)      # vfc1
    wv2, bv2 = linear(k3, hidden2, 1)            # vfc2
    wa1, ba1 = linear(k4, hidden1, hidden2)      # afc1
    wa2, ba2 = linear(k5, hidden2, action_size)  # afc2
    return (w1, b1, wv1, bv1, wv2, bv2, wa1, ba1, wa2, ba2)


def dueling_forward_ref(states, params):
    """Plain-JAX reference using the same bf16-rounded parameters the kernel sees."""
    def q16(p):
        return p.astype(jnp.bfloat16).astype(jnp.float32)
    (w1, b1, wv1, bv1, wv2, bv2, wa1, ba1, wa2, ba2) = [q16(p) for p in params]

    def one_call(state):
        x = jax.nn.relu(state @ w1 + b1)
        v = jax.nn.relu(x @ wv1 + bv1)
        v = v @ wv2 + bv2
        a = jax.nn.relu(x @ wa1 + ba1)
        a = a @ wa2 + ba2
        return v + a - jnp.mean(a)

    return jax.vmap(one_call)(states)


if __name__ == "__main__":
    N_CALLS, B, STATE_SIZE, ACTION_SIZE = 4, 8, 16, 4

    key = jax.random.PRNGKey(0)
    k_state, k_params = jax.random.split(key)
    states = jax.random.normal(k_state, (N_CALLS, B, STATE_SIZE), jnp.float32)
    params = init_params(k_params, STATE_SIZE, ACTION_SIZE)

    packed, offsets = pack_params(params, STATE_SIZE, ACTION_SIZE)

    q = dueling_forward(states, packed, offsets, ACTION_SIZE)
    jax.block_until_ready(q)

    q_ref = dueling_forward_ref(states, params)
    assert q.shape == (N_CALLS, B, ACTION_SIZE)
    assert jnp.allclose(q, q_ref, atol=1e-4, rtol=1e-4), "mismatch vs JAX reference"

    print("KERNEL_OK")
</pallas_src>

<mosaic_0001>
module attributes {stable_mosaic.version = 11 : i64} {
  func.func @_dueling_kernel(%arg0: i32, %arg1: memref<8x16xf32, #tpu.memory_space<vmem>>, %arg2: memref<304x128xbf16, #tpu.memory_space<vmem>>, %arg3: memref<8x128xf32, #tpu.memory_space<vmem>>) attributes {dimension_semantics = [#tpu.dimension_semantics<parallel>], iteration_bounds = array<i64: 4>, scalar_prefetch = 0 : i64, scratch_operands = 0 : i64, tpu.core_type = #tpu.core_type<tc>, window_params = [{transform_indices = @transform_0, window_bounds = array<i64: 8, 16>}, {pipeline_mode = #tpu.pipeline_mode<synchronous>, transform_indices = @transform_1, window_bounds = array<i64: 304, 128>}, {transform_indices = @transform_2, window_bounds = array<i64: 8, 128>}]} {
    %c0 = arith.constant 0 : index
    %c0_0 = arith.constant 0 : index
    %0 = vector.load %arg2[%c0, %c0_0] : memref<304x128xbf16, #tpu.memory_space<vmem>>, vector<16x128xbf16>
    %1 = arith.extf %0 : vector<16x128xbf16> to vector<16x128xf32>
    %c32 = arith.constant 32 : index
    %c0_1 = arith.constant 0 : index
    %2 = vector.load %arg2[%c32, %c0_1] : memref<304x128xbf16, #tpu.memory_space<vmem>>, vector<128x128xbf16>
    %3 = arith.extf %2 : vector<128x128xbf16> to vector<128x128xf32>
    %c160 = arith.constant 160 : index
    %c0_2 = arith.constant 0 : index
    %4 = vector.load %arg2[%c160, %c0_2] : memref<304x128xbf16, #tpu.memory_space<vmem>>, vector<128x128xbf16>
    %5 = arith.extf %4 : vector<128x128xbf16> to vector<128x128xf32>
    %c16 = arith.constant 16 : index
    %c0_3 = arith.constant 0 : index
    %6 = vector.load %arg2[%c16, %c0_3] : memref<304x128xbf16, #tpu.memory_space<vmem>>, vector<16x128xbf16>
    %7 = arith.extf %6 : vector<16x128xbf16> to vector<16x128xf32>
    %cst = arith.constant dense<0.000000e+00> : vector<128xf32>
    %8 = vector.multi_reduction <add>, %7, %cst [0] : vector<16x128xf32> to vector<128xf32>
    %9 = vector.shape_cast %8 : vector<128xf32> to vector<1x128xf32>
    %c288 = arith.constant 288 : index
    %c0_4 = arith.constant 0 : index
    %10 = vector.load %arg2[%c288, %c0_4] : memref<304x128xbf16, #tpu.memory_space<vmem>>, vector<16x128xbf16>
    %11 = arith.extf %10 : vector<16x128xbf16> to vector<16x128xf32>
    %cst_5 = arith.constant dense<0.000000e+00> : vector<128xf32>
    %12 = vector.multi_reduction <add>, %11, %cst_5 [0] : vector<16x128xf32> to vector<128xf32>
    %13 = vector.shape_cast %12 : vector<128xf32> to vector<1x128xf32>
    %c0_6 = arith.constant 0 : index
    %c0_7 = arith.constant 0 : index
    %14 = vector.load %arg1[%c0_6, %c0_7] : memref<8x16xf32, #tpu.memory_space<vmem>>, vector<8x16xf32>
    %cst_8 = arith.constant dense<0.000000e+00> : vector<8x128xf32>
    %15 = tpu.matmul %14, %1, %cst_8 {dimension_numbers = #tpu.dot_dimension_numbers<[1], [0], [0], [1], [0, 0, 1, 1], [], []>} : vector<8x16xf32>, vector<16x128xf32>, vector<8x128xf32> -> vector<8x128xf32>
    %16 = vector.broadcast %9 : vector<1x128xf32> to vector<8x128xf32>
    %17 = arith.addf %15, %16 : vector<8x128xf32>
    %cst_9 = arith.constant 0.000000e+00 : f32
    %18 = vector.broadcast %cst_9 : f32 to vector<8x128xf32>
    %19 = arith.maximumf %17, %18 : vector<8x128xf32>
    %cst_10 = arith.constant dense<0.000000e+00> : vector<8x128xf32>
    %20 = tpu.matmul %19, %3, %cst_10 {dimension_numbers = #tpu.dot_dimension_numbers<[1], [0], [0], [1], [0, 0, 1, 1], [], []>} : vector<8x128xf32>, vector<128x128xf32>, vector<8x128xf32> -> vector<8x128xf32>
    %cst_11 = arith.constant 0.000000e+00 : f32
    %21 = vector.broadcast %cst_11 : f32 to vector<8x128xf32>
    %22 = arith.maximumf %20, %21 : vector<8x128xf32>
    %cst_12 = arith.constant dense<0.000000e+00> : vector<8x128xf32>
    %23 = tpu.matmul %22, %5, %cst_12 {dimension_numbers = #tpu.dot_dimension_numbers<[1], [0], [0], [1], [0, 0, 1, 1], [], []>} : vector<8x128xf32>, vector<128x128xf32>, vector<8x128xf32> -> vector<8x128xf32>
    %24 = vector.broadcast %13 : vector<1x128xf32> to vector<8x128xf32>
    %25 = arith.addf %23, %24 : vector<8x128xf32>
    %26 = tpu.iota {dimensions = array<i32: 1>} : vector<8x128xi32>
    %c1_i32 = arith.constant 1 : i32
    %27 = vector.broadcast %c1_i32 : i32 to vector<8x128xi32>
    %28 = arith.cmpi sge, %26, %27 : vector<8x128xi32>
    %c4_i32 = arith.constant 4 : i32
    %29 = vector.broadcast %c4_i32 : i32 to vector<8x128xi32>
    %30 = arith.cmpi sle, %26, %29 : vector<8x128xi32>
    %31 = arith.andi %28, %30 : vector<8x128xi1>
    %cst_13 = arith.constant 0.000000e+00 : f32
    %32 = vector.broadcast %cst_13 : f32 to vector<8x128xf32>
    %33 = arith.select %31, %25, %32 : vector<8x128xi1>, vector<8x128xf32>
    %34 = vector.shape_cast %33 : vector<8x128xf32> to vector<1x8x128xf32>
    %cst_14 = arith.constant dense<0.000000e+00> : vector<1xf32>
    %35 = vector.multi_reduction <add>, %34, %cst_14 [1, 2] : vector<1x8x128xf32> to vector<1xf32>
    %36 = vector.shape_cast %35 : vector<1xf32> to vector<1x1x1xf32>
    %37 = vector.extract %36[0, 0, 0] : f32 from vector<1x1x1xf32>
    %cst_15 = arith.constant 3.125000e-02 : f32
    %38 = arith.mulf %37, %cst_15 : f32
    %39 = vector.extract_strided_slice %25 {offsets = [0, 0], sizes = [8, 1], strides = [1, 1]} : vector<8x128xf32> to vector<8x1xf32>
    %40 = vector.broadcast %39 : vector<8x1xf32> to vector<8x128xf32>
    %41 = arith.addf %40, %25 : vector<8x128xf32>
    %42 = vector.broadcast %38 : f32 to vector<8x128xf32>
    %43 = arith.subf %41, %42 : vector<8x128xf32>
    %cst_16 = arith.constant 0.000000e+00 : f32
    %44 = vector.broadcast %cst_16 : f32 to vector<8x128xf32>
    %45 = arith.select %31, %43, %44 : vector<8x128xi1>, vector<8x128xf32>
    %c0_17 = arith.constant 0 : index
    %c0_18 = arith.constant 0 : index
    %46 = vector.load %arg3[%c0_17, %c0_18] : memref<8x128xf32, #tpu.memory_space<vmem>>, vector<8x128xf32>
    tpu.vector_store %arg3[%c0_17, %c0_18], %45 {strides = array<i32>} : memref<8x128xf32, #tpu.memory_space<vmem>>, vector<8x128xf32>,
    return
  }
  func.func @transform_0(%arg0: i32) -> (i32, i32) {
    %c0_i32 = arith.constant 0 : i32
    %c0_i32_0 = arith.constant 0 : i32
    return %arg0, %c0_i32 : i32, i32
  }
  func.func @transform_1(%arg0: i32) -> (i32, i32) {
    %c0_i32 = arith.constant 0 : i32
    %c0_i32_0 = arith.constant 0 : i32
    %c0_i32_1 = arith.constant 0 : i32
    return %c0_i32, %c0_i32_0 : i32, i32
  }
  func.func @transform_2(%arg0: i32) -> (i32, i32) {
    %c0_i32 = arith.constant 0 : i32
    %c0_i32_0 = arith.constant 0 : i32
    return %arg0, %c0_i32 : i32, i32
  }
}

</mosaic_0001>

<llo_original>
// kernel: tpu_custom_call.1
$region0: #{tpu_custom_call.1}
  #allocation0 [shape = 'u32[]', space=smem, size = 0x4, offset = 0x4, fixed_abs, tag = 'smem constant byte address 0x4 - core index']
  #allocation1 [shape = 'u32[72,128]{1,0:T(1,128)}', space=vmem, size = 0x9000, scoped, tag = 'internal scratch']
  %s0 = inlined_call_operand.vmem [shape: f32[32,16], index: 0, kind: input, shape index: {}]
  %s1 = inlined_call_operand.hbm [shape: bf16[304,128], index: 1, kind: input, shape index: {}]
  %s2 = inlined_call_operand.hbm [shape: f32[32,128], index: 2, kind: output, shape index: {}]
  %s3 = sld [smem:[#allocation0]]
  $region45: #{tpu_custom_call.1} parent=0
    _
  %s5 = ssub.s32 1, %s3
  %s6 = scalar_select 0, %s5, %s3
  $region1: #{tpu_custom_call.1} parent=0
    #allocation2 [shape = 'u8[77824]{0}', space=vmem, size = 0x13000, scoped, tag = 'input window, operand 1, single buffered']
    #allocation3 [shape = 's32[2]{0}', space=sflag, size = 0x8, scoped, tag = 'scoped memory for tpu_custom_call.1']
    #allocation4 [shape = 's32[2]{0}', space=sflag, size = 0x8, scoped, tag = 'scoped memory for tpu_custom_call.1']
    #allocation5 [shape = 'u8[8192]{0}', space=vmem, size = 0x2000, scoped, tag = 'output window, operand 0']
    %7 = vsyncpa [#allocation3], 0
    %8 = vsyncpa [#allocation4], 0
    %s9 = scalar_lea.sflag [#allocation4], 1
    %10 = vsyncpa %s9, 0
    loop: start=0, step=1, limit=6
    $region2: #{tpu_custom_call.1} parent=1 // loop_pre_header
      _
    $region3: #{tpu_custom_call.1} parent=1 // loop_header
      %s12 = sphi 0, %s16
      %p13 = scmp.ge.s32.totalorder %s12, 6
      %s22 = sphi 0, %s24
      %s25 = sphi 0, %s22
      %s26 = sphi 0, %s25
      %s42 = sphi 0, %s26
      %s46 = sphi 0, %s46
      %s48 = sphi 0, %s46
      %s49 = sphi 0, %s48
      %s63 = sphi 0, %s49
      %s69 = sphi 0, %s71
      %s72 = sphi 0, %s69
      %s73 = sphi 0, %s72
      %s89 = sphi 0, %s73
    $region4: #{tpu_custom_call.1} parent=1 // loop_header_branch
      %15 = sbr.rel (%p13) target = $region8
    $region5: #{tpu_custom_call.1} parent=1 // loop_body
      %s17 = ssub.s32 %s12, 1
      %s18 = ssub.s32 %s12, 2
      %s19 = sadd.s32 %s12, 1
      %s20 = ssub.s32 %s12, %s19
      %p21 = scmp.eq.s32.totalorder %s20, 0
      %s23 = sadd.s32 %s22, 1
      %s24 = scalar_select %p21, %s22, %s23
      %p27 = pneg %p21
      %p28 = scmp.eq.s32.totalorder %s12, 3
      %p29 = por %p27, %p28
      %p30 = scmp.ne.s32.totalorder %s22, %s25
      %p31 = scmp.eq.s32.totalorder %s12, 0
      %p32 = por %p30, %p31
      %p33 = scmp.ne.s32.totalorder %s22, %s25
      %p34 = scmp.eq.s32.totalorder %s17, 3
      %p35 = por %p33, %p34
      %p36 = scmp.ne.s32.totalorder %s25, %s26
      %p37 = scmp.eq.s32.totalorder %s17, 0
      %p38 = por %p36, %p37
      %p39 = scmp.ne.s32.totalorder %s25, %s26
      %p40 = scmp.eq.s32.totalorder %s18, 3
      %p41 = por %p39, %p40
      %p43 = scmp.ne.s32.totalorder %s26, %s42
      %p44 = scmp.eq.s32.totalorder %s18, 0
      %p45 = por %p43, %p44
      %s47 = sadd.s32 %s46, 1
      %p50 = scmp.eq.s32.totalorder %s12, 3
      %p51 = scmp.ne.s32.totalorder %s46, %s48
      %p52 = scmp.eq.s32.totalorder %s12, 0
      %p53 = por %p51, %p52
      %p54 = scmp.ne.s32.totalorder %s46, %s48
      %p55 = scmp.eq.s32.totalorder %s17, 3
      %p56 = por %p54, %p55
      %p57 = scmp.ne.s32.totalorder %s48, %s49
      %p58 = scmp.eq.s32.totalorder %s17, 0
      %p59 = por %p57, %p58
      %p60 = scmp.ne.s32.totalorder %s48, %s49
      %p61 = scmp.eq.s32.totalorder %s18, 3
      %p62 = por %p60, %p61
      %p64 = scmp.ne.s32.totalorder %s49, %s63
      %p65 = scmp.eq.s32.totalorder %s18, 0
      %p66 = por %p64, %p65
      %s67 = ssub.s32 %s12, %s19
      %p68 = scmp.eq.s32.totalorder %s67, 0
      %s70 = sadd.s32 %s69, 1
      %s71 = scalar_select %p68, %s69, %s70
      %p74 = pneg %p68
      %p75 = scmp.eq.s32.totalorder %s12, 3
      %p76 = por %p74, %p75
      %p77 = scmp.ne.s32.totalorder %s69, %s72
      %p78 = scmp.eq.s32.totalorder %s12, 0
      %p79 = por %p77, %p78
      %p80 = scmp.ne.s32.totalorder %s69, %s72
      %p81 = scmp.eq.s32.totalorder %s17, 3
      %p82 = por %p80, %p81
      %p83 = scmp.ne.s32.totalorder %s72, %s73
      %p84 = scmp.eq.s32.totalorder %s17, 0
      %p85 = por %p83, %p84
      %p86 = scmp.ne.s32.totalorder %s72, %s73
      %p87 = scmp.eq.s32.totalorder %s18, 3
      %p88 = por %p86, %p87
      %p90 = scmp.ne.s32.totalorder %s73, %s89
      %p91 = scmp.eq.s32.totalorder %s18, 0
      %p92 = por %p90, %p91
      %p93 = scmp.le.s32.totalorder 1, %s12
      %p94 = scmp.lt.s32.totalorder %s12, 5
      %p95 = pnand %p93, %p94
      %p96 = pneg %p95
      // Predicated region
      $region9: #{tpu_custom_call.1} parent=5 // pred_check
        _
      $region10: #{tpu_custom_call.1} parent=5 // pred_check_branch
        %98 = sbr.rel (%p95) target = $region12
      $region11: #{tpu_custom_call.1} parent=5 // pred_region
        %s99 = ssub.s32 %s12, 1
        // Predicated region
        $region13: #{tpu_custom_call.1} parent=11 // pred_check
          %p100 = pneg %p59
        $region14: #{tpu_custom_call.1} parent=11 // pred_check_branch
          %102 = sbr.rel (%p100) target = $region16
        $region15: #{tpu_custom_call.1} parent=11 // pred_region
          %104 = vsyncadd [#allocation3], 0
          %s105 = sshll.u32 %s1, 4
          %s106 = int_to_ptr.hbm [resolvable:$true] %s105
          %s107 = sshll.u32 [#allocation2], 4
          %s108 = int_to_ptr.vmem [resolvable:$true] %s107
          %113 = dma.hbm_to_vmem [thread:$0]  %s106, 2432, %s108, [#allocation3], 64, 64, 4
        $region16: #{tpu_custom_call.1} parent=11 // pred_fallthru
          _
      $region12: #{tpu_custom_call.1} parent=5 // pred_fallthru
        _
      %p114 = scmp.lt.s32.totalorder %s12, 4
      // Predicated region
      $region17: #{tpu_custom_call.1} parent=5 // pred_check
        %p115 = pneg %p114
      $region18: #{tpu_custom_call.1} parent=5 // pred_check_branch
        %117 = sbr.rel (%p115) target = $region20
      $region19: #{tpu_custom_call.1} parent=5 // pred_region
        // Predicated region
        $region21: #{tpu_custom_call.1} parent=19 // pred_check
          %p118 = pneg %p32
        $region22: #{tpu_custom_call.1} parent=19 // pred_check_branch
          %120 = sbr.rel (%p118) target = $region24
        $region23: #{tpu_custom_call.1} parent=19 // pred_region
          %p121 = scmp.lt.s32.totalorder %s12, 3
          %s122 = scalar_select %p121, %s12, 3
          %s123 = smul.addr %s122, 8
          %s124 = scalar_lea.vmem %s0, %s123
        $region24: #{tpu_custom_call.1} parent=19 // pred_fallthru
          _
      $region20: #{tpu_custom_call.1} parent=5 // pred_fallthru
        _
      %p125 = scmp.le.s32.totalorder 1, %s12
      %p126 = scmp.lt.s32.totalorder %s12, 5
      %p127 = pnand %p125, %p126
      %p128 = pneg %p127
      // Predicated region
      $region25: #{tpu_custom_call.1} parent=5 // pred_check
        _
      $region26: #{tpu_custom_call.1} parent=5 // pred_check_branch
        %130 = sbr.rel (%p127) target = $region28
      $region27: #{tpu_custom_call.1} parent=5 // pred_region
        %s131 = ssub.s32 %s12, 1
        // Predicated region
        $region29: #{tpu_custom_call.1} parent=27 // pred_check
          %p132 = pneg %p59
        $region30: #{tpu_custom_call.1} parent=27 // pred_check_branch
          %134 = sbr.rel (%p132) target = $region32
        $region31: #{tpu_custom_call.1} parent=27 // pred_region
          %136 = dma.done [#allocation3], 2432
        $region32: #{tpu_custom_call.1} parent=27 // pred_fallthru
          _
        %p137 = scmp.lt.s32.totalorder %s17, 3
        %s138 = scalar_select %p137, %s17, 3
        %s139 = smul.addr %s138, 8
        %s140 = scalar_lea.vmem %s0, %s139
        %p141 = pneg %p38
        %p142 = pneg %p35
        %p143 = pneg %p59
        %p144 = pneg %p56
        %p145 = pneg %p85
        %p146 = pneg %p82
        %s147 = sand.u32 %s72, 1
        %s148 = scalar_lea.sflag [#allocation4], %s147
        %s149 = sand.u32 %s72, 1
        %s150 = smul.addr %s149, 8
        %s151 = scalar_lea.vmem [#allocation5], %s150
        %p152 = scmp.lt.s32.totalorder %s17, 3
        %s153 = scalar_select %p152, %s17, 3
        %s154 = smul.addr %s153, 8
        %s155 = scalar_lea.vmem %s0, %s154
        %v156 = vld [vmem:[#allocation2] sm:$0xf]
        %v157 = vld [vmem:[#allocation2 + $0x4] sm:$0xf]
        %v158 = vunpack.c.l.bf16 %v156
        %v159 = vunpack.c.l.bf16 %v157
        %v160 = vld [vmem:[#allocation2 + $0x10] sm:$0xf]
        %v161 = vld [vmem:[#allocation2 + $0x14] sm:$0xf]
        %v162 = vld [vmem:[#allocation2 + $0x18] sm:$0xf]
        %v163 = vld [vmem:[#allocation2 + $0x1c] sm:$0xf]
        %v164 = vld [vmem:[#allocation2 + $0x20] sm:$0xf]
        %v165 = vld [vmem:[#allocation2 + $0x24] sm:$0xf]
        %v166 = vld [vmem:[#allocation2 + $0x28] sm:$0xf]
        %v167 = vld [vmem:[#allocation2 + $0x2c] sm:$0xf]
        %v168 = vld [vmem:[#allocation2 + $0x30] sm:$0xf]
        %v169 = vld [vmem:[#allocation2 + $0x34] sm:$0xf]
        %v170 = vld [vmem:[#allocation2 + $0x38] sm:$0xf]
        %v171 = vld [vmem:[#allocation2 + $0x3c] sm:$0xf]
        %v172 = vld [vmem:[#allocation2 + $0x40] sm:$0xf]
        %v173 = vld [vmem:[#allocation2 + $0x44] sm:$0xf]
        %v174 = vld [vmem:[#allocation2 + $0x48] sm:$0xf]
        %v175 = vld [vmem:[#allocation2 + $0x4c] sm:$0xf]
        %v176 = vunpack.c.l.bf16 %v160
        %v177 = vunpack.c.l.bf16 %v161
        %v178 = vunpack.c.l.bf16 %v162
        %v179 = vunpack.c.l.bf16 %v163
        %v180 = vunpack.c.l.bf16 %v164
        %v181 = vunpack.c.l.bf16 %v165
        %v182 = vunpack.c.l.bf16 %v166
        %v183 = vunpack.c.l.bf16 %v167
        %v184 = vunpack.c.l.bf16 %v168
        %v185 = vunpack.c.l.bf16 %v169
        %v186 = vunpack.c.l.bf16 %v170
        %v187 = vunpack.c.l.bf16 %v171
        %v188 = vunpack.c.l.bf16 %v172
        %v189 = vunpack.c.l.bf16 %v173
        %v190 = vunpack.c.l.bf16 %v174
        %v191 = vunpack.c.l.bf16 %v175
        %v192 = vld [vmem:[#allocation2 + $0x50] sm:$0xf]
        %v193 = vld [vmem:[#allocation2 + $0x54] sm:$0xf]
        %v194 = vld [vmem:[#allocation2 + $0x58] sm:$0xf]
        %v195 = vld [vmem:[#allocation2 + $0x5c] sm:$0xf]
        %v196 = vld [vmem:[#allocation2 + $0x60] sm:$0xf]
        %v197 = vld [vmem:[#allocation2 + $0x64] sm:$0xf]
        %v198 = vld [vmem:[#allocation2 + $0x68] sm:$0xf]
        %v199 = vld [vmem:[#allocation2 + $0x6c] sm:$0xf]
        %v200 = vld [vmem:[#allocation2 + $0x70] sm:$0xf]
        %v201 = vld [vmem:[#allocation2 + $0x74] sm:$0xf]
        %v202 = vld [vmem:[#allocation2 + $0x78] sm:$0xf]
        %v203 = vld [vmem:[#allocation2 + $0x7c] sm:$0xf]
        %v204 = vld [vmem:[#allocation2 + $0x80] sm:$0xf]
        %v205 = vld [vmem:[#allocation2 + $0x84] sm:$0xf]
        %v206 = vld [vmem:[#allocation2 + $0x88] sm:$0xf]
        %v207 = vld [vmem:[#allocation2 + $0x8c] sm:$0xf]
        %v208 = vunpack.c.l.bf16 %v192
        %v209 = vunpack.c.l.bf16 %v193
        %v210 = vunpack.c.l.bf16 %v194
        %v211 = vunpack.c.l.bf16 %v195
        %v212 = vunpack.c.l.bf16 %v196
        %v213 = vunpack.c.l.bf16 %v197
        %v214 = vunpack.c.l.bf16 %v198
        %v215 = vunpack.c.l.bf16 %v199
        %v216 = vunpack.c.l.bf16 %v200
        %v217 = vunpack.c.l.bf16 %v201
        %v218 = vunpack.c.l.bf16 %v202
        %v219 = vunpack.c.l.bf16 %v203
        %v220 = vunpack.c.l.bf16 %v204
        %v221 = vunpack.c.l.bf16 %v205
        %v222 = vunpack.c.l.bf16 %v206
        %v223 = vunpack.c.l.bf16 %v207
        %v224 = vld [vmem:[#allocation2 + $0x8] sm:$0xf]
        %v225 = vld [vmem:[#allocation2 + $0xc] sm:$0xf]
        %v226 = vunpack.c.l.bf16 %v224
        %v227 = vunpack.c.l.bf16 %v225
        %v228 = vadd.f32 %v226, %v227
        %v229 = vrot.slane %v228, 4
        %v230 = vadd.f32 %v228, %v229
        %v231 = vrot.slane %v230, 2
        %v232 = vadd.f32 %v230, %v231
        %v233 = vrot.slane %v232, 1
        %v234 = vadd.f32 %v232, %v233
        %v235 = vld [vmem:[#allocation2 + $0x90] sm:$0xf]
        %v236 = vld [vmem:[#allocation2 + $0x94] sm:$0xf]
        %v237 = vunpack.c.l.bf16 %v235
        %v238 = vunpack.c.l.bf16 %v236
        %v239 = vadd.f32 %v237, %v238
        %v240 = vrot.slane %v239, 4
        %v241 = vadd.f32 %v239, %v240
        %v242 = vrot.slane %v241, 2
        %v243 = vadd.f32 %v241, %v242
        %v244 = vrot.slane %v243, 1
        %v245 = vadd.f32 %v243, %v244
        %v246 = vld [vmem:[%s155] sm:$0xff]
        %vm247 = vcmask 130048
        %v249 = vsel %vm247, %v246, 0
        %251 = vmatpush.msra.mxu0 0.0
        %252 = vmatpush.msra.mxu0 0.0
        %253 = vmatpush.msra.mxu0 0.0
        %254 = vmatpush.msra.mxu0 0.0
        %255 = vmatpush.msra.mxu0 0.0
        %256 = vmatpush.msra.mxu0 0.0
        %257 = vmatpush.msra.mxu0 0.0
        %258 = vmatpush.msra.mxu0 0.0
        %259 = vmatpush.msra.mxu0 0.0
        %260 = vmatpush.msra.mxu0 0.0
        %261 = vmatpush.msra.mxu0 0.0
        %262 = vmatpush.msra.mxu0 0.0
        %263 = vmatpush.msra.mxu0 0.0
        %264 = vmatpush.msra.mxu0 0.0
        %265 = vmatpush.msra.mxu0 %v159
        %266 = vmatpush.msra.mxu0 %v158
        %267 = vmatmul.f32.gmra.mxu0 %v249
        %v268 = vpop.f32.mrf.mxu0
        %v269 = vadd.f32 %v234, %v268
        %270 = vdwg.mxu0
        %v271 = vmax.f32 %v269, 0.0
        %272 = vmatpush.msra.mxu0 %v191
        %273 = vmatpush.msra.mxu0 %v190
        %274 = vmatpush.msra.mxu0 %v189
        %275 = vmatpush.msra.mxu0 %v188
        %276 = vmatpush.msra.mxu0 %v187
        %277 = vmatpush.msra.mxu0 %v186
        %278 = vmatpush.msra.mxu0 %v185
        %279 = vmatpush.msra.mxu0 %v184
        %280 = vmatpush.msra.mxu0 %v183
        %281 = vmatpush.msra.mxu0 %v182
        %282 = vmatpush.msra.mxu0 %v181
        %283 = vmatpush.msra.mxu0 %v180
        %284 = vmatpush.msra.mxu0 %v179
        %285 = vmatpush.msra.mxu0 %v178
        %286 = vmatpush.msra.mxu0 %v177
        %287 = vmatpush.msra.mxu0 %v176
        %288 = vmatmul.f32.gmra.mxu0 %v271
        %v289 = vpop.f32.mrf.mxu0
        %v290 = vadd.f32 0.0, %v289
        %291 = vdwg.mxu0
        %v292 = vmax.f32 %v290, 0.0
        %293 = vmatpush.msra.mxu0 %v223
        %294 = vmatpush.msra.mxu0 %v222
        %295 = vmatpush.msra.mxu0 %v221
        %296 = vmatpush.msra.mxu0 %v220
        %297 = vmatpush.msra.mxu0 %v219
        %298 = vmatpush.msra.mxu0 %v218
        %299 = vmatpush.msra.mxu0 %v217
        %300 = vmatpush.msra.mxu0 %v216
        %301 = vmatpush.msra.mxu0 %v215
        %302 = vmatpush.msra.mxu0 %v214
        %303 = vmatpush.msra.mxu0 %v213
        %304 = vmatpush.msra.mxu0 %v212
        %305 = vmatpush.msra.mxu0 %v211
        %306 = vmatpush.msra.mxu0 %v210
        %307 = vmatpush.msra.mxu0 %v209
        %308 = vmatpush.msra.mxu0 %v208
        %309 = vmatmul.f32.gmra.mxu0 %v292
        %v310 = vpop.f32.mrf.mxu0
        %v311 = vadd.f32 %v245, %v310
        %312 = vdwg.mxu0
        %v313 = vlaneseq
        %v314 = vand.u32 %v313, 127
        %vm315 = vcmp.ge.s32.totalorder %v314, 1
        %vm316 = vcmp.le.s32.totalorder %v314, 4
        %vm317 = vmand %vm315, %vm316
        %v318 = vsel %vm317, %v311, 0.0
        %319 = vadd.xlane.f32.xlu0 %v318
        %v320 = vpop.xlane.xlu0 %319
        %v321 = vrot.slane %v320, 4
        %v322 = vadd.f32 %v320, %v321
        %v323 = vrot.slane %v322, 2
        %v324 = vadd.f32 %v322, %v323
        %v325 = vrot.slane %v324, 1
        %v326 = vadd.f32 %v324, %v325
        %s327 = vtos %v326
        %s328 = smul.f32 %s327, 0.03125
        %330 = vset.pattern.permute.xlu0 0
        %331 = vperm.xlu0 %330, %v311
        %v332 = vpop.permute.xlu0 %331
        %v334 = vadd.f32 %v332, %v311
        %v335 = vstv %s328
        %v336 = vsub.f32 %v334, %v335
        %v337 = vsel %vm317, %v336, 0.0
        %338 = vst [vmem:[%s151] sm:$0xff] %v337
        %s339 = sand.u32 %s72, 1
        %s340 = scalar_lea.sflag [#allocation4], %s339
        %s341 = sand.u32 %s72, 1
        %s342 = smul.addr %s341, 8
        %s343 = scalar_lea.vmem [#allocation5], %s342
        // Predicated region
        $region33: #{tpu_custom_call.1} parent=27 // pred_check
          %p344 = pneg %p82
        $region34: #{tpu_custom_call.1} parent=27 // pred_check_branch
          %346 = sbr.rel (%p344) target = $region36
        $region35: #{tpu_custom_call.1} parent=27 // pred_region
          %348 = vsyncadd %s340, 0
          %s349 = smul.addr %s17, 8
          %s350 = scalar_lea.hbm %s2, %s349
          %s352 = sshll.u32 %s343, 4
          %s353 = int_to_ptr.vmem [resolvable:$true] %s352
          %s354 = sshll.u32 %s350, 4
          %s355 = int_to_ptr.hbm [resolvable:$true] %s354
          %357 = dma.vmem_to_hbm [thread:$0]  %s353, 128, %s355, %s340
        $region36: #{tpu_custom_call.1} parent=27 // pred_fallthru
          _
      $region28: #{tpu_custom_call.1} parent=5 // pred_fallthru
        _
      %p358 = scmp.le.s32.totalorder 2, %s12
      // Predicated region
      $region37: #{tpu_custom_call.1} parent=5 // pred_check
        %p359 = pneg %p358
      $region38: #{tpu_custom_call.1} parent=5 // pred_check_branch
        %361 = sbr.rel (%p359) target = $region40
      $region39: #{tpu_custom_call.1} parent=5 // pred_region
        %s362 = ssub.s32 %s12, 2
        // Predicated region
        $region41: #{tpu_custom_call.1} parent=39 // pred_check
          %p363 = pneg %p88
        $region42: #{tpu_custom_call.1} parent=39 // pred_check_branch
          %365 = sbr.rel (%p363) target = $region44
        $region43: #{tpu_custom_call.1} parent=39 // pred_region
          %s366 = sand.u32 %s73, 1
          %s367 = scalar_lea.sflag [#allocation4], %s366
          %s368 = sand.u32 %s73, 1
          %s369 = smul.addr %s368, 8
          %s370 = scalar_lea.vmem [#allocation5], %s369
          %372 = dma.done %s367, 128
        $region44: #{tpu_custom_call.1} parent=39 // pred_fallthru
          _
      $region40: #{tpu_custom_call.1} parent=5 // pred_fallthru
        _
    $region6: #{tpu_custom_call.1} parent=1 // loop_footer
      %s16 = sadd.s32 1, %s12
    $region7: #{tpu_custom_call.1} parent=1 // loop_footer_branch
      %11 = sbr.rel target = $region3
    $region8: #{tpu_custom_call.1} parent=1 // loop_exit
      _
    %373 = vsyncpa [#allocation3], 1
    %s374 = scalar_lea.sflag [#allocation3], 1
    %375 = vsyncpa %s374, 1
    %376 = vsyncpa [#allocation4], 1
    %s377 = scalar_lea.sflag [#allocation4], 1
    %378 = vsyncpa %s377, 1

</llo_original>
